<compile_context>
chip_gen: v7x
topology: tpu7x:2x2x1
jax: 0.10.0
libtpu: 0.0.40
codegen_flags: <defaults>
</compile_context>

<pallas_src>
import functools

import jax
import jax.numpy as jnp
from jax.experimental import pallas as pl
from jax.experimental.pallas import tpu as pltpu


def _round_up(x, m):
    return (x + m - 1) // m * m


def _mlp_kernel(has_first, n_mid, apply_softmax, *refs):
    """Refs (in order): x, [w_first, b_first], [w_mid, b_mid], w_last, b_last, out.

    x:       (b_tile, isize_pad) f32
    w_first: (isize_pad, dpad)   bf16,  b_first: (1, dpad) f32
    w_mid:   (n_mid, dpad, dpad) bf16,  b_mid:   (n_mid, 1, dpad) f32
    w_last:  (dpad|isize_pad, nact) bf16, b_last: (1, nact) f32
    out:     (b_tile, nact) f32

    Padding lanes/rows in all slabs are zero, so the padded network is exactly
    equivalent to the original (tanh(0+0) == 0 propagates zeros).
    """
    refs = list(refs)
    x_ref = refs.pop(0)
    h = x_ref[...]  # (b_tile, isize_pad) f32

    if has_first:
        w0_ref = refs.pop(0)
        b0_ref = refs.pop(0)
        h = jnp.tanh(
            jnp.dot(h.astype(w0_ref.dtype), w0_ref[...],
                    preferred_element_type=jnp.float32)
            + b0_ref[...]
        )

    if n_mid > 0:
        wm_ref = refs.pop(0)
        bm_ref = refs.pop(0)
        for i in range(n_mid):  # static unroll over hidden layers
            h = jnp.tanh(
                jnp.dot(h.astype(wm_ref.dtype), wm_ref[i],
                        preferred_element_type=jnp.float32)
                + bm_ref[i]
            )

    wl_ref = refs.pop(0)
    bl_ref = refs.pop(0)
    out_ref = refs.pop(0)

    logits = (
        jnp.dot(h.astype(wl_ref.dtype), wl_ref[...],
                preferred_element_type=jnp.float32)
        + bl_ref[...]
    )  # (b_tile, nact) f32 -- no padded action lanes, so no masking needed

    if apply_softmax:
        m = jnp.max(logits, axis=-1, keepdims=True)
        e = jnp.exp(logits - m)
        s = jnp.sum(e, axis=-1, keepdims=True)
        out_ref[...] = e * pl.reciprocal(s, approx=True)  # divide -> EUP slot
    else:
        out_ref[...] = logits


def pack_params(weights, biases, dpad=128, param_dtype=jnp.bfloat16):
    """One-time parameter prep (casts / padding hoisted out of the call path).

    weights[i]: (in_i, out_i)  so that  y = x @ W + b   (torch weight transposed)
    biases[i]:  (out_i,)

    Returns a dict of zero-padded slabs:
      'w_first' (isize_pad, dpad) / 'b_first' (1, dpad)         [if L >= 2]
      'w_mid'   (L-2, dpad, dpad) / 'b_mid'   (L-2, 1, dpad)    [if L >= 3]
      'w_last'  (dpad or isize_pad, nact) / 'b_last' (1, nact)
    Weight slabs are `param_dtype` (bf16); biases stay f32.
    """
    L = len(weights)
    assert L >= 1
    isize = int(weights[0].shape[0])
    nact = int(weights[-1].shape[1])
    isize_pad = _round_up(isize, 8)
    assert all(w.shape[0] <= dpad and w.shape[1] <= dpad for w in weights), (
        "layer width exceeds pad width")

    params = {}
    if L == 1:
        wl = jnp.zeros((isize_pad, nact), param_dtype)
        wl = wl.at[:isize, :].set(jnp.asarray(weights[0], param_dtype))
        params["w_last"] = wl
        params["b_last"] = jnp.asarray(biases[0], jnp.float32).reshape(1, nact)
        return params

    # First layer: (isize -> h1), padded to (isize_pad, dpad).
    h1 = int(weights[0].shape[1])
    w0 = jnp.zeros((isize_pad, dpad), param_dtype)
    w0 = w0.at[:isize, :h1].set(jnp.asarray(weights[0], param_dtype))
    b0 = jnp.zeros((1, dpad), jnp.float32)
    b0 = b0.at[0, :h1].set(jnp.asarray(biases[0], jnp.float32))
    params["w_first"] = w0
    params["b_first"] = b0

    # Middle hidden layers packed into one slab.
    n_mid = L - 2
    if n_mid > 0:
        wm = jnp.zeros((n_mid, dpad, dpad), param_dtype)
        bm = jnp.zeros((n_mid, 1, dpad), jnp.float32)
        for i in range(1, L - 1):
            din, dout = weights[i].shape
            wm = wm.at[i - 1, :din, :dout].set(jnp.asarray(weights[i], param_dtype))
            bm = bm.at[i - 1, 0, :dout].set(jnp.asarray(biases[i], jnp.float32))
        params["w_mid"] = wm
        params["b_mid"] = bm

    # Last layer: (h_last -> nact), narrow output (no padded action lanes).
    dlast = int(weights[-1].shape[0])
    wl = jnp.zeros((dpad, nact), param_dtype)
    wl = wl.at[:dlast, :].set(jnp.asarray(weights[-1], param_dtype))
    params["w_last"] = wl
    params["b_last"] = jnp.asarray(biases[-1], jnp.float32).reshape(1, nact)
    return params


@functools.partial(jax.jit, static_argnames=("sf",))
def _forward_batched(x2d, params, *, sf):
    B, isize = x2d.shape
    has_first = "w_first" in params
    n_mid = params["w_mid"].shape[0] if "w_mid" in params else 0
    nact = params["w_last"].shape[1]
    if has_first:
        isize_pad, dpad = params["w_first"].shape
    else:
        isize_pad = params["w_last"].shape[0]

    # --- batch tiling: big tiles to amortize per-grid-step overhead; then
    # ensure >= 2 steps (when splittable) so v7x megacore gets both cores busy.
    b_tile = min(2048, _round_up(max(B, 1), 8))
    if _round_up(B, b_tile) // b_tile < 2 and b_tile > 8:
        b_tile = max(8, _round_up(b_tile // 2, 8))
    b_padded = _round_up(B, b_tile)
    grid = (b_padded // b_tile,)

    # --- input stays narrow: (b_padded, isize_pad), not 128 lanes.
    x_f32 = x2d.astype(jnp.float32)
    if b_padded != B or isize_pad != isize:
        x_in = jnp.zeros((b_padded, isize_pad), jnp.float32)
        x_in = x_in.at[:B, :isize].set(x_f32)
    else:
        x_in = x_f32

    args = [x_in]
    in_specs = [pl.BlockSpec((b_tile, isize_pad), lambda i: (i, 0))]
    if has_first:
        args += [params["w_first"], params["b_first"]]
        in_specs += [
            pl.BlockSpec((isize_pad, dpad), lambda i: (0, 0)),   # resident
            pl.BlockSpec((1, dpad), lambda i: (0, 0)),           # resident
        ]
    if n_mid > 0:
        args += [params["w_mid"], params["b_mid"]]
        in_specs += [
            pl.BlockSpec((n_mid, dpad, dpad), lambda i: (0, 0, 0)),  # resident
            pl.BlockSpec((n_mid, 1, dpad), lambda i: (0, 0, 0)),     # resident
        ]
    wlast_rows = params["w_last"].shape[0]
    args += [params["w_last"], params["b_last"]]
    in_specs += [
        pl.BlockSpec((wlast_rows, nact), lambda i: (0, 0)),
        pl.BlockSpec((1, nact), lambda i: (0, 0)),
    ]

    kernel = functools.partial(_mlp_kernel, has_first, n_mid, sf)
    out = pl.pallas_call(
        kernel,
        out_shape=jax.ShapeDtypeStruct((b_padded, nact), jnp.float32),
        grid=grid,
        in_specs=in_specs,
        out_specs=pl.BlockSpec((b_tile, nact), lambda i: (i, 0)),
        compiler_params=pltpu.CompilerParams(
            dimension_semantics=("parallel",),
        ),
    )(*args)

    return out if b_padded == B else out[:B]


def regular_network_forward(x, params, sf=True):
    """x: (isize,) or (B, isize).  Returns (nact,) or (B, nact)."""
    x = jnp.asarray(x)
    single = x.ndim == 1
    x2d = x[None, :] if single else x
    out = _forward_batched(x2d, params, sf=sf)
    return out[0] if single else out


def _reference_forward(x2d, weights, biases, sf=True):
    h = jnp.asarray(x2d, jnp.float32)
    for w, b in zip(weights[:-1], biases[:-1]):
        h = jnp.tanh(h @ jnp.asarray(w, jnp.float32) + jnp.asarray(b, jnp.float32))
    logits = (h @ jnp.asarray(weights[-1], jnp.float32)
              + jnp.asarray(biases[-1], jnp.float32))
    return jax.nn.softmax(logits, axis=-1) if sf else logits


if __name__ == "__main__":
    # Pole Balance setup: isize=4 (cart-pole state), hsizes=[32, 32],
    # NBACTIONS=2, sf=True.
    isize = 4
    hsizes = [32, 32]
    nbactions = 2
    batch = 8

    in_sizes = [isize] + hsizes
    out_sizes = hsizes + [nbactions]

    key = jax.random.PRNGKey(0)
    key, xkey = jax.random.split(key)
    xb = jax.random.normal(xkey, (batch, isize), dtype=jnp.float32)

    # Deterministic parameter init (uniform, torch-Linear-like fan_in bound).
    weights, biases = [], []
    for din, dout in zip(in_sizes, out_sizes):
        key, wk, bk = jax.random.split(key, 3)
        bound = 1.0 / (din ** 0.5)
        weights.append(jax.random.uniform(wk, (din, dout), jnp.float32, -bound, bound))
        biases.append(jax.random.uniform(bk, (dout,), jnp.float32, -bound, bound))

    # One-time parameter packing (bf16 weight slabs, f32 biases).
    params = pack_params(weights, biases)

    # bf16 weights/activations in the dots => compare against the f32
    # reference with a correspondingly loosened tolerance.
    atol = rtol = 3e-2

    # Batched softmax path.
    out_b = jax.block_until_ready(regular_network_forward(xb, params, sf=True))
    ref_b = _reference_forward(xb, weights, biases, sf=True)
    assert out_b.shape == (batch, nbactions)
    assert jnp.allclose(out_b, ref_b, atol=atol, rtol=rtol), (out_b, ref_b)

    # Single-state path (matches the original 1-D module interface).
    out_1 = jax.block_until_ready(regular_network_forward(xb[0], params, sf=True))
    assert out_1.shape == (nbactions,)
    assert jnp.allclose(out_1, ref_b[0], atol=atol, rtol=rtol), (out_1, ref_b[0])

    # Logits path (sf=False).
    out_nl = jax.block_until_ready(regular_network_forward(xb, params, sf=False))
    ref_nl = _reference_forward(xb, weights, biases, sf=False)
    assert jnp.allclose(out_nl, ref_nl, atol=atol, rtol=rtol), (out_nl, ref_nl)

    # Non-multiple batch: exercises batch padding, the >=2-step "parallel"
    # grid (megacore path), and the trailing batch slice.
    key, xkey2 = jax.random.split(key)
    xb2 = jax.random.normal(xkey2, (24, isize), dtype=jnp.float32)
    out_b2 = jax.block_until_ready(regular_network_forward(xb2, params, sf=True))
    ref_b2 = _reference_forward(xb2, weights, biases, sf=True)
    assert out_b2.shape == (24, nbactions)
    assert jnp.allclose(out_b2, ref_b2, atol=atol, rtol=rtol), (out_b2, ref_b2)

    print("KERNEL_OK")
</pallas_src>

<mosaic_0001>
module attributes {stable_mosaic.version = 11 : i64} {
  func.func @_mlp_kernel(%arg0: i32, %arg1: memref<8x8xf32, #tpu.memory_space<vmem>>, %arg2: memref<8x128xbf16, #tpu.memory_space<vmem>>, %arg3: memref<1x128xf32, #tpu.memory_space<vmem>>, %arg4: memref<1x128x128xbf16, #tpu.memory_space<vmem>>, %arg5: memref<1x1x128xf32, #tpu.memory_space<vmem>>, %arg6: memref<128x2xbf16, #tpu.memory_space<vmem>>, %arg7: memref<1x2xf32, #tpu.memory_space<vmem>>, %arg8: memref<8x2xf32, #tpu.memory_space<vmem>>) attributes {dimension_semantics = [#tpu.dimension_semantics<parallel>], iteration_bounds = array<i64: 1>, scalar_prefetch = 0 : i64, scratch_operands = 0 : i64, tpu.core_type = #tpu.core_type<tc>, window_params = [{transform_indices = @transform_0, window_bounds = array<i64: 8, 8>}, {pipeline_mode = #tpu.pipeline_mode<synchronous>, transform_indices = @transform_1, window_bounds = array<i64: 8, 128>}, {pipeline_mode = #tpu.pipeline_mode<synchronous>, transform_indices = @transform_2, window_bounds = array<i64: 1, 128>}, {pipeline_mode = #tpu.pipeline_mode<synchronous>, transform_indices = @transform_3, window_bounds = array<i64: 1, 128, 128>}, {pipeline_mode = #tpu.pipeline_mode<synchronous>, transform_indices = @transform_4, window_bounds = array<i64: 1, 1, 128>}, {pipeline_mode = #tpu.pipeline_mode<synchronous>, transform_indices = @transform_5, window_bounds = array<i64: 128, 2>}, {pipeline_mode = #tpu.pipeline_mode<synchronous>, transform_indices = @transform_6, window_bounds = array<i64: 1, 2>}, {transform_indices = @transform_7, window_bounds = array<i64: 8, 2>}]} {
    %c0 = arith.constant 0 : index
    %c0_0 = arith.constant 0 : index
    %0 = vector.load %arg1[%c0, %c0_0] : memref<8x8xf32, #tpu.memory_space<vmem>>, vector<8x8xf32>
    %1 = arith.truncf %0 : vector<8x8xf32> to vector<8x8xbf16>
    %c0_1 = arith.constant 0 : index
    %c0_2 = arith.constant 0 : index
    %2 = vector.load %arg2[%c0_1, %c0_2] : memref<8x128xbf16, #tpu.memory_space<vmem>>, vector<8x128xbf16>
    %cst = arith.constant dense<0.000000e+00> : vector<8x128xf32>
    %3 = tpu.matmul %1, %2, %cst {dimension_numbers = #tpu.dot_dimension_numbers<[1], [0], [0], [1], [0, 0, 1, 1], [], []>} : vector<8x8xbf16>, vector<8x128xbf16>, vector<8x128xf32> -> vector<8x128xf32>
    %c0_3 = arith.constant 0 : index
    %c0_4 = arith.constant 0 : index
    %4 = vector.load %arg3[%c0_3, %c0_4] : memref<1x128xf32, #tpu.memory_space<vmem>>, vector<1x128xf32>
    %5 = vector.broadcast %4 : vector<1x128xf32> to vector<8x128xf32>
    %6 = arith.addf %3, %5 : vector<8x128xf32>
    %7 = math.tanh %6 : vector<8x128xf32>
    %8 = arith.truncf %7 : vector<8x128xf32> to vector<8x128xbf16>
    %c0_5 = arith.constant 0 : index
    %c0_6 = arith.constant 0 : index
    %c0_7 = arith.constant 0 : index
    %9 = vector.load %arg4[%c0_5, %c0_6, %c0_7] : memref<1x128x128xbf16, #tpu.memory_space<vmem>>, vector<1x128x128xbf16>
    %10 = vector.shape_cast %9 : vector<1x128x128xbf16> to vector<128x128xbf16>
    %cst_8 = arith.constant dense<0.000000e+00> : vector<8x128xf32>
    %11 = tpu.matmul %8, %10, %cst_8 {dimension_numbers = #tpu.dot_dimension_numbers<[1], [0], [0], [1], [0, 0, 1, 1], [], []>} : vector<8x128xbf16>, vector<128x128xbf16>, vector<8x128xf32> -> vector<8x128xf32>
    %c0_9 = arith.constant 0 : index
    %c0_10 = arith.constant 0 : index
    %c0_11 = arith.constant 0 : index
    %12 = vector.load %arg5[%c0_9, %c0_10, %c0_11] : memref<1x1x128xf32, #tpu.memory_space<vmem>>, vector<1x1x128xf32>
    %13 = vector.shape_cast %12 : vector<1x1x128xf32> to vector<1x128xf32>
    %14 = vector.broadcast %13 : vector<1x128xf32> to vector<8x128xf32>
    %15 = arith.addf %11, %14 : vector<8x128xf32>
    %16 = math.tanh %15 : vector<8x128xf32>
    %17 = arith.truncf %16 : vector<8x128xf32> to vector<8x128xbf16>
    %c0_12 = arith.constant 0 : index
    %c0_13 = arith.constant 0 : index
    %18 = vector.load %arg6[%c0_12, %c0_13] : memref<128x2xbf16, #tpu.memory_space<vmem>>, vector<128x2xbf16>
    %cst_14 = arith.constant dense<0.000000e+00> : vector<8x2xf32>
    %19 = tpu.matmul %17, %18, %cst_14 {dimension_numbers = #tpu.dot_dimension_numbers<[1], [0], [0], [1], [0, 0, 1, 1], [], []>} : vector<8x128xbf16>, vector<128x2xbf16>, vector<8x2xf32> -> vector<8x2xf32>
    %c0_15 = arith.constant 0 : index
    %c0_16 = arith.constant 0 : index
    %20 = vector.load %arg7[%c0_15, %c0_16] : memref<1x2xf32, #tpu.memory_space<vmem>>, vector<1x2xf32>
    %21 = vector.broadcast %20 : vector<1x2xf32> to vector<8x2xf32>
    %22 = arith.addf %19, %21 : vector<8x2xf32>
    %cst_17 = arith.constant dense<0xFF800000> : vector<8xf32>
    %23 = vector.multi_reduction <maximumf>, %22, %cst_17 [1] : vector<8x2xf32> to vector<8xf32>
    %24 = vector.shape_cast %23 : vector<8xf32> to vector<8x1xf32>
    %25 = vector.broadcast %24 : vector<8x1xf32> to vector<8x2xf32>
    %26 = arith.subf %22, %25 : vector<8x2xf32>
    %27 = math.exp %26 : vector<8x2xf32>
    %cst_18 = arith.constant dense<0.000000e+00> : vector<8xf32>
    %28 = vector.multi_reduction <add>, %27, %cst_18 [1] : vector<8x2xf32> to vector<8xf32>
    %29 = vector.shape_cast %28 : vector<8xf32> to vector<8x1xf32>
    %30 = tpu.reciprocal %29 {approx = true} : vector<8x1xf32> -> vector<8x1xf32>
    %31 = vector.broadcast %30 : vector<8x1xf32> to vector<8x2xf32>
    %32 = arith.mulf %27, %31 : vector<8x2xf32>
    %c0_19 = arith.constant 0 : index
    %c0_20 = arith.constant 0 : index
    %33 = vector.load %arg8[%c0_19, %c0_20] : memref<8x2xf32, #tpu.memory_space<vmem>>, vector<8x2xf32>
    tpu.vector_store %arg8[%c0_19, %c0_20], %32 {strides = array<i32>} : memref<8x2xf32, #tpu.memory_space<vmem>>, vector<8x2xf32>,
    return
  }
  func.func @transform_0(%arg0: i32) -> (i32, i32) {
    %c0_i32 = arith.constant 0 : i32
    %c0_i32_0 = arith.constant 0 : i32
    return %arg0, %c0_i32 : i32, i32
  }
  func.func @transform_1(%arg0: i32) -> (i32, i32) {
    %c0_i32 = arith.constant 0 : i32
    %c0_i32_0 = arith.constant 0 : i32
    %c0_i32_1 = arith.constant 0 : i32
    return %c0_i32, %c0_i32_0 : i32, i32
  }
  func.func @transform_2(%arg0: i32) -> (i32, i32) {
    %c0_i32 = arith.constant 0 : i32
    %c0_i32_0 = arith.constant 0 : i32
    %c0_i32_1 = arith.constant 0 : i32
    return %c0_i32, %c0_i32_0 : i32, i32
  }
  func.func @transform_3(%arg0: i32) -> (i32, i32, i32) {
    %c0_i32 = arith.constant 0 : i32
    %c0_i32_0 = arith.constant 0 : i32
    %c0_i32_1 = arith.constant 0 : i32
    %c0_i32_2 = arith.constant 0 : i32
    return %c0_i32, %c0_i32_0, %c0_i32_1 : i32, i32, i32
  }
  func.func @transform_4(%arg0: i32) -> (i32, i32, i32) {
    %c0_i32 = arith.constant 0 : i32
    %c0_i32_0 = arith.constant 0 : i32
    %c0_i32_1 = arith.constant 0 : i32
    %c0_i32_2 = arith.constant 0 : i32
    return %c0_i32, %c0_i32_0, %c0_i32_1 : i32, i32, i32
  }
  func.func @transform_5(%arg0: i32) -> (i32, i32) {
    %c0_i32 = arith.constant 0 : i32
    %c0_i32_0 = arith.constant 0 : i32
    %c0_i32_1 = arith.constant 0 : i32
    return %c0_i32, %c0_i32_0 : i32, i32
  }
  func.func @transform_6(%arg0: i32) -> (i32, i32) {
    %c0_i32 = arith.constant 0 : i32
    %c0_i32_0 = arith.constant 0 : i32
    %c0_i32_1 = arith.constant 0 : i32
    return %c0_i32, %c0_i32_0 : i32, i32
  }
  func.func @transform_7(%arg0: i32) -> (i32, i32) {
    %c0_i32 = arith.constant 0 : i32
    %c0_i32_0 = arith.constant 0 : i32
    return %arg0, %c0_i32 : i32, i32
  }
}

</mosaic_0001>

<llo_original>
// kernel: _forward_batched.1
$region0: #{_forward_batched.1}
  #allocation0 [shape = 'u32[]', space=smem, size = 0x4, offset = 0x4, fixed_abs, tag = 'smem constant byte address 0x4 - core index']
  #allocation1 [shape = 'u32[144,128]{1,0:T(1,128)}', space=vmem, size = 0x12000, scoped, tag = 'internal scratch']
  %s0 = inlined_call_operand.vmem [shape: f32[8,8], index: 0, kind: input, shape index: {}]
  %s1 = inlined_call_operand.vmem [shape: bf16[8,128], index: 1, kind: input, shape index: {}]
  %s2 = inlined_call_operand.vmem [shape: f32[1,128], index: 2, kind: input, shape index: {}]
  %s3 = inlined_call_operand.vmem [shape: bf16[1,128,128], index: 3, kind: input, shape index: {}]
  %s4 = inlined_call_operand.vmem [shape: f32[1,1,128], index: 4, kind: input, shape index: {}]
  %s5 = inlined_call_operand.vmem [shape: bf16[128,2], index: 5, kind: input, shape index: {}]
  %s6 = inlined_call_operand.vmem [shape: f32[1,2], index: 6, kind: input, shape index: {}]
  %s7 = inlined_call_operand.vmem [shape: f32[8,2], index: 7, kind: output, shape index: {}]
  %s8 = sld [smem:[#allocation0]]
  $region38: #{_forward_batched.1} parent=0
    _
  %s10 = ssub.s32 1, %s8
  %s11 = scalar_select 0, %s10, %s8
  // Predicated region
  $region2: #{_forward_batched.1} parent=0 // pred_check
    _
  $region3: #{_forward_batched.1} parent=0 // pred_check_branch
    %13 = sbr.rel (0) target = $region5
  $region4: #{_forward_batched.1} parent=0 // pred_region
    _
  $region5: #{_forward_batched.1} parent=0 // pred_fallthru
    _
  // Predicated region
  $region6: #{_forward_batched.1} parent=0 // pred_check
    _
  $region7: #{_forward_batched.1} parent=0 // pred_check_branch
    %15 = sbr.rel (0) target = $region9
  $region8: #{_forward_batched.1} parent=0 // pred_region
    _
  $region9: #{_forward_batched.1} parent=0 // pred_fallthru
    _
  // Predicated region
  $region10: #{_forward_batched.1} parent=0 // pred_check
    _
  $region11: #{_forward_batched.1} parent=0 // pred_check_branch
    %17 = sbr.rel (0) target = $region13
  $region12: #{_forward_batched.1} parent=0 // pred_region
    _
  $region13: #{_forward_batched.1} parent=0 // pred_fallthru
    _
  // Predicated region
  $region14: #{_forward_batched.1} parent=0 // pred_check
    _
  $region15: #{_forward_batched.1} parent=0 // pred_check_branch
    %19 = sbr.rel (0) target = $region17
  $region16: #{_forward_batched.1} parent=0 // pred_region
    _
  $region17: #{_forward_batched.1} parent=0 // pred_fallthru
    _
  // Predicated region
  $region18: #{_forward_batched.1} parent=0 // pred_check
    _
  $region19: #{_forward_batched.1} parent=0 // pred_check_branch
    %21 = sbr.rel (0) target = $region21
  $region20: #{_forward_batched.1} parent=0 // pred_region
    _
  $region21: #{_forward_batched.1} parent=0 // pred_fallthru
    _
  // Predicated region
  $region22: #{_forward_batched.1} parent=0 // pred_check
    _
  $region23: #{_forward_batched.1} parent=0 // pred_check_branch
    %23 = sbr.rel (0) target = $region25
  $region24: #{_forward_batched.1} parent=0 // pred_region
    _
  $region25: #{_forward_batched.1} parent=0 // pred_fallthru
    _
  // Predicated region
  $region26: #{_forward_batched.1} parent=0 // pred_check
    _
  $region27: #{_forward_batched.1} parent=0 // pred_check_branch
    %25 = sbr.rel (0) target = $region29
  $region28: #{_forward_batched.1} parent=0 // pred_region
    _
  $region29: #{_forward_batched.1} parent=0 // pred_fallthru
    _
  %v27 = vld [vmem:[%s0] sm:$0xff]
  %v28 = vpack.c.bf16 %v27, %v27
  %v29 = vld [vmem:[%s1] sm:$0xf]
  %v30 = vld [vmem:[%s2] sm:$0x1]
  %v32 = vlaneseq
  %v33 = vshrl.u32 %v32, 7
  %v34 = vsub.s32 0, %v33
  %v35 = vrot.slane %v30, %v34
  %vm37 = vcmask 64512
  %v39 = vsel %vm37, %v28, 0
  %vm41 = vcmask 1043456
  %v43 = vsel %vm41, %v29, 0
  %45 = vmatprep.subr.bf16.mxu0 0
  %46 = vmatpush1.bf16.msra.mxu0 %v43
  %47 = vmatprep.subr.bf16.mxu0 0
  %48 = vmatpush1.bf16.msra.mxu0 0
  %49 = vmatprep.subr.bf16.mxu0 0
  %50 = vmatpush1.bf16.msra.mxu0 0
  %51 = vmatprep.subr.bf16.mxu0 0
  %52 = vmatpush1.bf16.msra.mxu0 0
  %53 = vmatprep.subr.bf16.mxu0 0
  %54 = vmatpush1.bf16.msra.mxu0 0
  %55 = vmatprep.subr.bf16.mxu0 0
  %56 = vmatpush1.bf16.msra.mxu0 0
  %57 = vmatprep.subr.bf16.mxu0 0
  %58 = vmatpush1.bf16.msra.mxu0 0
  %59 = vmatprep.subr.bf16.mxu0 0
  %60 = vmatpush1.bf16.msra.mxu0 0
  %61 = vmatprep.subr.bf16.mxu0 0
  %62 = vmatpush1.bf16.msra.mxu0 0
  %63 = vmatprep.subr.bf16.mxu0 0
  %64 = vmatpush1.bf16.msra.mxu0 0
  %65 = vmatprep.subr.bf16.mxu0 0
  %66 = vmatpush1.bf16.msra.mxu0 0
  %67 = vmatprep.subr.bf16.mxu0 0
  %68 = vmatpush1.bf16.msra.mxu0 0
  %69 = vmatprep.subr.bf16.mxu0 0
  %70 = vmatpush1.bf16.msra.mxu0 0
  %71 = vmatprep.subr.bf16.mxu0 0
  %72 = vmatpush1.bf16.msra.mxu0 0
  %73 = vmatprep.subr.bf16.mxu0 0
  %74 = vmatpush1.bf16.msra.mxu0 0
  %75 = vmatprep.subr.bf16.mxu0 0
  %76 = vmatpush1.bf16.msra.mxu0 0
  %77 = vmatprep.mubr.bf16.mxu0 0
  %78 = vmatmul.mubr.bf16.gmra.mrb[0].mxu0 %v39
  %v79 = vpop.f32.mrb[0].mxu0
  %v80 = vadd.f32 %v35, %v79
  %v81 = vpop.f32.mrb[0].mxu0
  %v82 = vpop.f32.mrb[0].mxu0
  %v83 = vpop.f32.mrb[0].mxu0
  %84 = vdwg.mxu0
  %v85 = vtanh.pop %v80
  %v86 = vpack.c.bf16 %v85, %v85
  %v87 = vld [vmem:[%s3] sm:$0xf]
  %v88 = vld [vmem:[%s3 + $0x4] sm:$0xf]
  %v89 = vld [vmem:[%s3 + $0x8] sm:$0xf]
  %v90 = vld [vmem:[%s3 + $0xc] sm:$0xf]
  %v91 = vld [vmem:[%s3 + $0x10] sm:$0xf]
  %v92 = vld [vmem:[%s3 + $0x14] sm:$0xf]
  %v93 = vld [vmem:[%s3 + $0x18] sm:$0xf]
  %v94 = vld [vmem:[%s3 + $0x1c] sm:$0xf]
  %v95 = vld [vmem:[%s3 + $0x20] sm:$0xf]
  %v96 = vld [vmem:[%s3 + $0x24] sm:$0xf]
  %v97 = vld [vmem:[%s3 + $0x28] sm:$0xf]
  %v98 = vld [vmem:[%s3 + $0x2c] sm:$0xf]
  %v99 = vld [vmem:[%s3 + $0x30] sm:$0xf]
  %v100 = vld [vmem:[%s3 + $0x34] sm:$0xf]
  %v101 = vld [vmem:[%s3 + $0x38] sm:$0xf]
  %v102 = vld [vmem:[%s3 + $0x3c] sm:$0xf]
  %v103 = vld [vmem:[%s4] sm:$0x1]
  %v105 = vlaneseq
  %v106 = vshrl.u32 %v105, 7
  %v107 = vsub.s32 0, %v106
  %v108 = vrot.slane %v103, %v107
  %v126 = vunpack.c.l.b16 %v87
  %v127 = vunpack.c.l.b16 %v88
  %v128 = vunpack.c.l.b16 %v89
  %v129 = vunpack.c.l.b16 %v90
  %v130 = vunpack.c.l.b16 %v91
  %v131 = vunpack.c.l.b16 %v92
  %v132 = vunpack.c.l.b16 %v93
  %v133 = vunpack.c.l.b16 %v94
  %v134 = vunpack.c.l.b16 %v95
  %v135 = vunpack.c.l.b16 %v96
  %v136 = vunpack.c.l.b16 %v97
  %v137 = vunpack.c.l.b16 %v98
  %v138 = vunpack.c.l.b16 %v99
  %v139 = vunpack.c.l.b16 %v100
  %v140 = vunpack.c.l.b16 %v101
  %v141 = vunpack.c.l.b16 %v102
  %v142 = vpack.c.b16 %v127, %v126
  %v143 = vpack.c.b16 %v129, %v128
  %v144 = vpack.c.b16 %v131, %v130
  %v145 = vpack.c.b16 %v133, %v132
  %v146 = vpack.c.b16 %v135, %v134
  %v147 = vpack.c.b16 %v137, %v136
  %v148 = vpack.c.b16 %v139, %v138
  %v149 = vpack.c.b16 %v141, %v140
  %158 = vmatprep.subr.bf16.mxu0 0
  %159 = vmatpush1.bf16.msra.mxu0 %v142
  %160 = vmatprep.subr.bf16.mxu0 0
  %161 = vmatpush1.bf16.msra.mxu0 %v143
  %162 = vmatprep.subr.bf16.mxu0 0
  %163 = vmatpush1.bf16.msra.mxu0 %v144
  %164 = vmatprep.subr.bf16.mxu0 0
  %165 = vmatpush1.bf16.msra.mxu0 %v145
  %166 = vmatprep.subr.bf16.mxu0 0
  %167 = vmatpush1.bf16.msra.mxu0 %v146
  %168 = vmatprep.subr.bf16.mxu0 0
  %169 = vmatpush1.bf16.msra.mxu0 %v147
  %170 = vmatprep.subr.bf16.mxu0 0
  %171 = vmatpush1.bf16.msra.mxu0 %v148
  %172 = vmatprep.subr.bf16.mxu0 0
  %173 = vmatpush1.bf16.msra.mxu0 %v149
  %174 = vmatprep.subr.bf16.mxu0 0
  %175 = vmatpush1.bf16.msra.mxu0 0
  %176 = vmatprep.subr.bf16.mxu0 0
  %177 = vmatpush1.bf16.msra.mxu0 0
  %178 = vmatprep.subr.bf16.mxu0 0
  %179 = vmatpush1.bf16.msra.mxu0 0
  %180 = vmatprep.subr.bf16.mxu0 0
  %181 = vmatpush1.bf16.msra.mxu0 0
  %182 = vmatprep.subr.bf16.mxu0 0
  %183 = vmatpush1.bf16.msra.mxu0 0
  %184 = vmatprep.subr.bf16.mxu0 0
  %185 = vmatpush1.bf16.msra.mxu0 0
  %186 = vmatprep.subr.bf16.mxu0 0
  %187 = vmatpush1.bf16.msra.mxu0 0
  %188 = vmatprep.subr.bf16.mxu0 0
  %189 = vmatpush1.bf16.msra.mxu0 0
  %190 = vmatprep.mubr.bf16.mxu0 0
  %191 = vmatmul.mubr.bf16.gmra.mrb[0].mxu0 %v86
  %v192 = vpop.f32.mrb[0].mxu0
  %v193 = vadd.f32 %v108, %v192
  %v194 = vpop.f32.mrb[0].mxu0
  %v195 = vpop.f32.mrb[0].mxu0
  %v196 = vpop.f32.mrb[0].mxu0
  %197 = vdwg.mxu0
  %v198 = vtanh.pop %v193
  %v199 = vpack.c.bf16 %v198, %v198
  %v200 = vld [vmem:[%s5] sm:$0xf]
  %v201 = vld [vmem:[%s5 + $0x4] sm:$0xf]
  %v202 = vld [vmem:[%s5 + $0x8] sm:$0xf]
  %v203 = vld [vmem:[%s5 + $0xc] sm:$0xf]
  %v204 = vld [vmem:[%s5 + $0x10] sm:$0xf]
  %v205 = vld [vmem:[%s5 + $0x14] sm:$0xf]
  %v206 = vld [vmem:[%s5 + $0x18] sm:$0xf]
  %v207 = vld [vmem:[%s5 + $0x1c] sm:$0xf]
  %v208 = vld [vmem:[%s5 + $0x20] sm:$0xf]
  %v209 = vld [vmem:[%s5 + $0x24] sm:$0xf]
  %v210 = vld [vmem:[%s5 + $0x28] sm:$0xf]
  %v211 = vld [vmem:[%s5 + $0x2c] sm:$0xf]
  %v212 = vld [vmem:[%s5 + $0x30] sm:$0xf]
  %v213 = vld [vmem:[%s5 + $0x34] sm:$0xf]
  %v214 = vld [vmem:[%s5 + $0x38] sm:$0xf]
  %v215 = vld [vmem:[%s5 + $0x3c] sm:$0xf]
  %v216 = vld [vmem:[%s6] sm:$0x1]
  %v218 = vlaneseq
  %v219 = vshrl.u32 %v218, 7
  %v220 = vsub.s32 0, %v219
  %v221 = vrot.slane %v216, %v220
  %v239 = vunpack.c.l.b16 %v200
  %v240 = vunpack.c.l.b16 %v201
  %v241 = vunpack.c.l.b16 %v202
  %v242 = vunpack.c.l.b16 %v203
  %v243 = vunpack.c.l.b16 %v204
  %v244 = vunpack.c.l.b16 %v205
  %v245 = vunpack.c.l.b16 %v206
  %v246 = vunpack.c.l.b16 %v207
  %v247 = vunpack.c.l.b16 %v208
  %v248 = vunpack.c.l.b16 %v209
  %v249 = vunpack.c.l.b16 %v210
  %v250 = vunpack.c.l.b16 %v211
  %v251 = vunpack.c.l.b16 %v212
  %v252 = vunpack.c.l.b16 %v213
  %v253 = vunpack.c.l.b16 %v214
  %v254 = vunpack.c.l.b16 %v215
  %v255 = vpack.c.b16 %v240, %v239
  %v256 = vpack.c.b16 %v242, %v241
  %v257 = vpack.c.b16 %v244, %v243
  %v258 = vpack.c.b16 %v246, %v245
  %v259 = vpack.c.b16 %v248, %v247
  %v260 = vpack.c.b16 %v250, %v249
  %v261 = vpack.c.b16 %v252, %v251
  %v262 = vpack.c.b16 %v254, %v253
  %271 = vmatprep.subr.bf16.mxu0 0
  %272 = vmatpush1.bf16.msra.mxu0 %v255
  %273 = vmatprep.subr.bf16.mxu0 0
  %274 = vmatpush1.bf16.msra.mxu0 %v256
  %275 = vmatprep.subr.bf16.mxu0 0
  %276 = vmatpush1.bf16.msra.mxu0 %v257
  %277 = vmatprep.subr.bf16.mxu0 0
  %278 = vmatpush1.bf16.msra.mxu0 %v258
  %279 = vmatprep.subr.bf16.mxu0 0
  %280 = vmatpush1.bf16.msra.mxu0 %v259
  %281 = vmatprep.subr.bf16.mxu0 0
  %282 = vmatpush1.bf16.msra.mxu0 %v260
  %283 = vmatprep.subr.bf16.mxu0 0
  %284 = vmatpush1.bf16.msra.mxu0 %v261
  %285 = vmatprep.subr.bf16.mxu0 0
  %286 = vmatpush1.bf16.msra.mxu0 %v262
  %287 = vmatprep.subr.bf16.mxu0 0
  %288 = vmatpush1.bf16.msra.mxu0 0
  %289 = vmatprep.subr.bf16.mxu0 0
  %290 = vmatpush1.bf16.msra.mxu0 0
  %291 = vmatprep.subr.bf16.mxu0 0
  %292 = vmatpush1.bf16.msra.mxu0 0
  %293 = vmatprep.subr.bf16.mxu0 0
  %294 = vmatpush1.bf16.msra.mxu0 0
  %295 = vmatprep.subr.bf16.mxu0 0
  %296 = vmatpush1.bf16.msra.mxu0 0
  %297 = vmatprep.subr.bf16.mxu0 0
  %298 = vmatpush1.bf16.msra.mxu0 0
  %299 = vmatprep.subr.bf16.mxu0 0
  %300 = vmatpush1.bf16.msra.mxu0 0
  %301 = vmatprep.subr.bf16.mxu0 0
  %302 = vmatpush1.bf16.msra.mxu0 0
  %303 = vmatprep.mubr.bf16.mxu0 0
  %304 = vmatmul.mubr.bf16.gmra.mrb[0].mxu0 %v199
  %v305 = vpop.f32.mrb[0].mxu0
  %v306 = vadd.f32 %v221, %v305
  %v307 = vpop.f32.mrb[0].mxu0
  %v308 = vpop.f32.mrb[0].mxu0
  %v309 = vpop.f32.mrb[0].mxu0
  %310 = vdwg.mxu0
  %vm311 = vcmask 15360
  %v312 = vsel %vm311, %v306, -inf
  %313 = vmax.xlane.f32.xlu0 %v312
  %v314 = vpop.xlane.xlu0 %313
  %v315 = vsub.f32 %v306, %v314
  %v316 = vmul.f32 %v315, 1.442695
  %v317 = vpow.pop %v316
  %v318 = vsel %vm311, %v317, 0.0
  %319 = vadd.xlane.f32.xlu0 %v318
  %v320 = vpop.xlane.xlu0 %319
  %v321 = vrcp.pop %v320
  %v322 = vmul.f32 %v317, %v321
  %323 = vst.msk [vmem:[%s7] sm:$0xff] %vm311, %v322
  // Predicated region
  $region30: #{_forward_batched.1} parent=0 // pred_check
    _
  $region31: #{_forward_batched.1} parent=0 // pred_check_branch
    %325 = sbr.rel (0) target = $region33
  $region32: #{_forward_batched.1} parent=0 // pred_region
    _
  $region33: #{_forward_batched.1} parent=0 // pred_fallthru
    _
  // Predicated region
  $region34: #{_forward_batched.1} parent=0 // pred_check
    _
  $region35: #{_forward_batched.1} parent=0 // pred_check_branch
    %327 = sbr.rel (0) target = $region37
  $region36: #{_forward_batched.1} parent=0 // pred_region
    _
  $region37: #{_forward_batched.1} parent=0 // pred_fallthru
    _

</llo_original>
